<compile_context>
chip_gen: v7x
topology: tpu7x:2x2x1
jax: 0.10.0
libtpu: 0.0.40
codegen_flags: <defaults>
</compile_context>

<pallas_src>
import jax
import jax.numpy as jnp
from jax.experimental import pallas as pl
from jax.experimental.pallas import tpu as pltpu


_BLOCK_BUDGET_BYTES = 4 * 1024 * 1024  # combined (positions+features) bytes per grid step


def _aggregate_kernel(pos_ref, feat_ref, out_ref):
    # pos_ref : (TB, P, LT) block of positions
    # feat_ref: (TB, F, LT) block of features
    # out_ref : (TB, C=P+F) lane-dense running-max accumulator (resident across L axis)
    p = pos_ref.shape[1]
    pos_max = jnp.max(pos_ref[...], axis=-1)    # (TB, P)  one lane-reduce per block
    feat_max = jnp.max(feat_ref[...], axis=-1)  # (TB, F)

    @pl.when(pl.program_id(1) == 0)
    def _init():
        out_ref[:, :p] = pos_max
        out_ref[:, p:] = feat_max

    @pl.when(pl.program_id(1) != 0)
    def _accumulate():
        out_ref[:, :p] = jnp.maximum(out_ref[:, :p], pos_max)
        out_ref[:, p:] = jnp.maximum(out_ref[:, p:], feat_max)


def _pick_tiles(n, c, l, itemsize, batch_tile, l_tile,
                budget_bytes=_BLOCK_BUDGET_BYTES):
    """Choose (batch_tile, l_tile) so one combined input block stays under budget."""
    auto_l = l_tile is None
    if auto_l:
        l_tile = l

    if batch_tile is None:
        per_row = c * l_tile * itemsize                      # bytes per batch row per step
        tb = max(1, budget_bytes // max(per_row, 1))
        tb = min(tb, 512, n)
        if tb < n:
            tb = min(max(8, (tb // 8) * 8), n)               # output sublane tiling: mult of 8
        batch_tile = tb
    batch_tile = min(batch_tile, n)

    # If even the chosen batch tile with the full sequence busts the budget, tile L
    # (lane-aligned divisors only; fall back to full L if none exists).
    if auto_l and batch_tile * c * l_tile * itemsize > budget_bytes:
        target = budget_bytes // max(batch_tile * c * itemsize, 1)
        cand = (max(target, 128) // 128) * 128
        while cand >= 128:
            if l % cand == 0:
                l_tile = cand
                break
            cand -= 128

    return batch_tile, l_tile


def aggregate(positions, features, *, batch_tile=None, l_tile=None):
    """cat((positions, features), dim=1) followed by adaptive_max_pool1d(., 1).

    positions: (N, P, L), features: (N, F, L)  ->  (N, P+F, 1)
    """
    n, p, l = positions.shape
    n2, f, l2 = features.shape
    assert n == n2 and l == l2, "positions / features batch or sequence mismatch"
    c = p + f

    # torch.cat promotes mixed dtypes; mirror that explicitly.
    out_dtype = jnp.promote_types(positions.dtype, features.dtype)
    positions = positions.astype(out_dtype)
    features = features.astype(out_dtype)
    itemsize = jnp.dtype(out_dtype).itemsize

    tb, lt = _pick_tiles(n, c, l, itemsize, batch_tile, l_tile)
    if tb < n:
        assert tb % 8 == 0, "batch_tile must be a multiple of 8 (output sublane tiling)"
    if lt < l:
        assert l % lt == 0 and lt % 128 == 0, \
            "l_tile must divide L and be a multiple of 128 (lane alignment)"

    grid = (pl.cdiv(n, tb), l // lt)  # batch tiles (parallel) x sequence tiles (reduction)

    out2d = pl.pallas_call(
        _aggregate_kernel,
        out_shape=jax.ShapeDtypeStruct((n, c), out_dtype),
        grid_spec=pltpu.PrefetchScalarGridSpec(
            num_scalar_prefetch=0,
            grid=grid,
            in_specs=[
                pl.BlockSpec((tb, p, lt), lambda b, li: (b, 0, li)),
                pl.BlockSpec((tb, f, lt), lambda b, li: (b, 0, li)),
            ],
            # Same output block across the L axis -> VMEM-resident running-max accumulator.
            out_specs=pl.BlockSpec((tb, c), lambda b, li: (b, 0)),
        ),
        compiler_params=pltpu.CompilerParams(
            dimension_semantics=("parallel", "arbitrary"),
            vmem_limit_bytes=32 * 1024 * 1024,
        ),
    )(positions, features)

    # Restore adaptive_max_pool1d's trailing length-1 axis (free reshape in the wrapper,
    # keeping the kernel's stores lane-dense).
    return out2d[:, :, None]


def local_interaction_forward(positions, features, global_features,
                              *, batch_tile=None, l_tile=None):
    """Mirror of LocalInteraction / ProximalInteraction .forward.

    Note: for tiny inputs (a few KB) the plain `jnp.max(concat(...))` reference is
    cheaper than any kernel launch; dispatch at the caller if that matters.
    """
    aggregated = aggregate(positions, features, batch_tile=batch_tile, l_tile=l_tile)
    # TODO(synk): extract_xyz / ts.to_graph / ts.DistanceStructure / update_global /
    # update_local are abstract or external in the reference module — passed through
    # as identities here.
    return positions, features, global_features, aggregated


if __name__ == "__main__":
    key = jax.random.PRNGKey(0)
    k1, k2, k3 = jax.random.split(key, 3)

    # batch, position-channels, feature-channels, sequence, global width
    N, P, F, L, G = 16, 4, 12, 256, 32

    positions = jax.random.normal(k1, (N, P, L), dtype=jnp.float32)
    features = jax.random.normal(k2, (N, F, L), dtype=jnp.float32)
    global_features = jax.random.normal(k3, (N, G), dtype=jnp.float32)

    # Plain-JAX reference of the PyTorch semantics (cat over channels, max over L).
    ref = jnp.max(jnp.concatenate([positions, features], axis=1),
                  axis=-1, keepdims=True)

    # (a) explicit tiling: exercises both the batch grid axis and the L running-max path.
    agg_tiled = aggregate(positions, features, batch_tile=8, l_tile=128)
    # (b) auto tiling: single L step, whole (small) batch per step.
    agg_auto = aggregate(positions, features)
    # (c) full forward mirror.
    pos_out, feat_out, glob_out, aggregated = local_interaction_forward(
        positions, features, global_features)

    jax.block_until_ready((agg_tiled, agg_auto, pos_out, feat_out, glob_out, aggregated))

    assert agg_tiled.shape == (N, P + F, 1)
    assert jnp.allclose(agg_tiled, ref), "tiled aggregate mismatch vs reference"
    assert jnp.allclose(agg_auto, ref), "auto aggregate mismatch vs reference"
    assert jnp.allclose(aggregated, ref), "forward aggregate mismatch vs reference"
    assert pos_out.shape == positions.shape and feat_out.shape == features.shape
    assert glob_out.shape == global_features.shape

    print("KERNEL_OK")
</pallas_src>

<mosaic_0001>
module attributes {stable_mosaic.version = 11 : i64} {
  func.func @_aggregate_kernel(%arg0: i32, %arg1: i32, %arg2: memref<8x4x128xf32, #tpu.memory_space<vmem>>, %arg3: memref<8x12x128xf32, #tpu.memory_space<vmem>>, %arg4: memref<8x16xf32, #tpu.memory_space<vmem>>) attributes {dimension_semantics = [#tpu.dimension_semantics<parallel>, #tpu.dimension_semantics<arbitrary>], iteration_bounds = array<i64: 2, 2>, scalar_prefetch = 0 : i64, scratch_operands = 0 : i64, tpu.core_type = #tpu.core_type<tc>, window_params = [{transform_indices = @transform_0, window_bounds = array<i64: 8, 4, 128>}, {transform_indices = @transform_1, window_bounds = array<i64: 8, 12, 128>}, {transform_indices = @transform_2, window_bounds = array<i64: 8, 16>}]} {
    %c0 = arith.constant 0 : index
    %c0_0 = arith.constant 0 : index
    %c0_1 = arith.constant 0 : index
    %0 = vector.load %arg2[%c0, %c0_0, %c0_1] : memref<8x4x128xf32, #tpu.memory_space<vmem>>, vector<8x4x128xf32>
    %cst = arith.constant dense<0xFF800000> : vector<8x4xf32>
    %1 = vector.multi_reduction <maximumf>, %0, %cst [2] : vector<8x4x128xf32> to vector<8x4xf32>
    %c0_2 = arith.constant 0 : index
    %c0_3 = arith.constant 0 : index
    %c0_4 = arith.constant 0 : index
    %2 = vector.load %arg3[%c0_2, %c0_3, %c0_4] : memref<8x12x128xf32, #tpu.memory_space<vmem>>, vector<8x12x128xf32>
    %cst_5 = arith.constant dense<0xFF800000> : vector<8x12xf32>
    %3 = vector.multi_reduction <maximumf>, %2, %cst_5 [2] : vector<8x12x128xf32> to vector<8x12xf32>
    %c0_i32 = arith.constant 0 : i32
    %4 = arith.cmpi eq, %arg1, %c0_i32 : i32
    %5 = arith.extui %4 : i1 to i32
    %c0_i32_6 = arith.constant 0 : i32
    %6 = arith.cmpi ne, %5, %c0_i32_6 : i32
    scf.if %6 {
      %c0_9 = arith.constant 0 : index
      %c0_10 = arith.constant 0 : index
      %10 = vector.load %arg4[%c0_9, %c0_10] : memref<8x16xf32, #tpu.memory_space<vmem>>, vector<8x4xf32>
      tpu.vector_store %arg4[%c0_9, %c0_10], %1 {strides = array<i32>} : memref<8x16xf32, #tpu.memory_space<vmem>>, vector<8x4xf32>,
      %c0_11 = arith.constant 0 : index
      %c4 = arith.constant 4 : index
      %11 = vector.load %arg4[%c0_11, %c4] : memref<8x16xf32, #tpu.memory_space<vmem>>, vector<8x12xf32>
      tpu.vector_store %arg4[%c0_11, %c4], %3 {strides = array<i32>} : memref<8x16xf32, #tpu.memory_space<vmem>>, vector<8x12xf32>,
    } else {
    }
    %c0_i32_7 = arith.constant 0 : i32
    %7 = arith.cmpi ne, %arg1, %c0_i32_7 : i32
    %8 = arith.extui %7 : i1 to i32
    %c0_i32_8 = arith.constant 0 : i32
    %9 = arith.cmpi ne, %8, %c0_i32_8 : i32
    scf.if %9 {
      %c0_9 = arith.constant 0 : index
      %c0_10 = arith.constant 0 : index
      %10 = vector.load %arg4[%c0_9, %c0_10] : memref<8x16xf32, #tpu.memory_space<vmem>>, vector<8x4xf32>
      %11 = arith.maximumf %10, %1 : vector<8x4xf32>
      %c0_11 = arith.constant 0 : index
      %c0_12 = arith.constant 0 : index
      %12 = vector.load %arg4[%c0_11, %c0_12] : memref<8x16xf32, #tpu.memory_space<vmem>>, vector<8x4xf32>
      tpu.vector_store %arg4[%c0_11, %c0_12], %11 {strides = array<i32>} : memref<8x16xf32, #tpu.memory_space<vmem>>, vector<8x4xf32>,
      %c0_13 = arith.constant 0 : index
      %c4 = arith.constant 4 : index
      %13 = vector.load %arg4[%c0_13, %c4] : memref<8x16xf32, #tpu.memory_space<vmem>>, vector<8x12xf32>
      %14 = arith.maximumf %13, %3 : vector<8x12xf32>
      %c0_14 = arith.constant 0 : index
      %c4_15 = arith.constant 4 : index
      %15 = vector.load %arg4[%c0_14, %c4_15] : memref<8x16xf32, #tpu.memory_space<vmem>>, vector<8x12xf32>
      tpu.vector_store %arg4[%c0_14, %c4_15], %14 {strides = array<i32>} : memref<8x16xf32, #tpu.memory_space<vmem>>, vector<8x12xf32>,
    } else {
    }
    return
  }
  func.func @transform_0(%arg0: i32, %arg1: i32) -> (i32, i32, i32) {
    %c0_i32 = arith.constant 0 : i32
    %c0_i32_0 = arith.constant 0 : i32
    return %arg0, %c0_i32, %arg1 : i32, i32, i32
  }
  func.func @transform_1(%arg0: i32, %arg1: i32) -> (i32, i32, i32) {
    %c0_i32 = arith.constant 0 : i32
    %c0_i32_0 = arith.constant 0 : i32
    return %arg0, %c0_i32, %arg1 : i32, i32, i32
  }
  func.func @transform_2(%arg0: i32, %arg1: i32) -> (i32, i32) {
    %c0_i32 = arith.constant 0 : i32
    %c0_i32_0 = arith.constant 0 : i32
    return %arg0, %c0_i32 : i32, i32
  }
}

</mosaic_0001>

<llo_original>
// kernel: tpu_custom_call.1
$region0: #{tpu_custom_call.1}
  #allocation0 [shape = 'u32[]', space=smem, size = 0x4, offset = 0x4, fixed_abs, tag = 'smem constant byte address 0x4 - core index']
  #allocation1 [shape = 'u32[144,128]{1,0:T(1,128)}', space=vmem, size = 0x12000, scoped, tag = 'internal scratch']
  %s0 = inlined_call_operand.vmem [shape: f32[16,4,256], index: 0, kind: input, shape index: {}]
  %s1 = inlined_call_operand.vmem [shape: f32[16,12,256], index: 1, kind: input, shape index: {}]
  %s2 = inlined_call_operand.hbm [shape: f32[16,16], index: 2, kind: output, shape index: {}]
  %s3 = sld [smem:[#allocation0]]
  $region128: #{tpu_custom_call.1} parent=0
    _
  %s5 = ssub.s32 1, %s3
  %s6 = scalar_select 0, %s5, %s3
  $region1: #{tpu_custom_call.1} parent=0
    #allocation2 [shape = 'u8[32768]{0}', space=vmem, size = 0x8000, scoped, tag = 'input window, operand 0']
    #allocation3 [shape = 'u8[131072]{0}', space=vmem, size = 0x20000, scoped, tag = 'input window, operand 1']
    #allocation4 [shape = 'u8[8192]{0}', space=vmem, size = 0x2000, scoped, tag = 'output window, operand 0']
    #allocation5 [shape = 's32[2]{0}', space=sflag, size = 0x8, scoped, tag = 'scoped memory for tpu_custom_call.1']
    %7 = vsyncpa [#allocation5], 0
    %s8 = scalar_lea.sflag [#allocation5], 1
    %9 = vsyncpa %s8, 0
    loop: start=0, step=1, limit=6
    $region2: #{tpu_custom_call.1} parent=1 // loop_pre_header
      _
    $region3: #{tpu_custom_call.1} parent=1 // loop_header
      %s11 = sphi 0, %s15
      %p12 = scmp.ge.s32.totalorder %s11, 6
      %s18 = sphi 0, %s30
      %s19 = sphi 0, %s26
      %s20 = sphi 0, %s18
      %s21 = sphi 0, %s19
      %s22 = sphi 0, %s20
      %s23 = sphi 0, %s21
      %s35 = sphi 0, %s37
      %s38 = sphi 0, %s35
      %s39 = sphi 0, %s38
      %s55 = sphi 0, %s39
      %s63 = sphi 0, %s65
      %s66 = sphi 0, %s63
      %s67 = sphi 0, %s66
      %s83 = sphi 0, %s67
      %s89 = sphi 0, %s91
      %s92 = sphi 0, %s89
      %s93 = sphi 0, %s92
      %s109 = sphi 0, %s93
    $region4: #{tpu_custom_call.1} parent=1 // loop_header_branch
      %14 = sbr.rel (%p12) target = $region8
    $region5: #{tpu_custom_call.1} parent=1 // loop_body
      %s16 = ssub.s32 %s11, 1
      %s17 = ssub.s32 %s11, 2
      %s24 = sadd.s32 1, %s19
      %p25 = scmp.ge.s32.totalorder %s24, 2
      %s26 = scalar_select %p25, 0, %s24
      %s27 = sadd.s32 1, %s18
      %s28 = scalar_select %p25, %s27, %s18
      %p29 = scmp.ge.s32.totalorder %s28, 2
      %s30 = scalar_select %p29, 0, %s28
      %s31 = ssub.s32 %s18, %s30
      %s32 = ssub.s32 %s19, %s26
      %s33 = sor.u32 %s31, %s32
      %p34 = scmp.eq.s32.totalorder %s33, 0
      %s36 = sadd.s32 %s35, 1
      %s37 = scalar_select %p34, %s35, %s36
      %p40 = pneg %p34
      %p41 = scmp.eq.s32.totalorder %s11, 3
      %p42 = por %p40, %p41
      %p43 = scmp.ne.s32.totalorder %s35, %s38
      %p44 = scmp.eq.s32.totalorder %s11, 0
      %p45 = por %p43, %p44
      %p46 = scmp.ne.s32.totalorder %s35, %s38
      %p47 = scmp.eq.s32.totalorder %s16, 3
      %p48 = por %p46, %p47
      %p49 = scmp.ne.s32.totalorder %s38, %s39
      %p50 = scmp.eq.s32.totalorder %s16, 0
      %p51 = por %p49, %p50
      %p52 = scmp.ne.s32.totalorder %s38, %s39
      %p53 = scmp.eq.s32.totalorder %s17, 3
      %p54 = por %p52, %p53
      %p56 = scmp.ne.s32.totalorder %s39, %s55
      %p57 = scmp.eq.s32.totalorder %s17, 0
      %p58 = por %p56, %p57
      %s59 = ssub.s32 %s18, %s30
      %s60 = ssub.s32 %s19, %s26
      %s61 = sor.u32 %s59, %s60
      %p62 = scmp.eq.s32.totalorder %s61, 0
      %s64 = sadd.s32 %s63, 1
      %s65 = scalar_select %p62, %s63, %s64
      %p68 = pneg %p62
      %p69 = scmp.eq.s32.totalorder %s11, 3
      %p70 = por %p68, %p69
      %p71 = scmp.ne.s32.totalorder %s63, %s66
      %p72 = scmp.eq.s32.totalorder %s11, 0
      %p73 = por %p71, %p72
      %p74 = scmp.ne.s32.totalorder %s63, %s66
      %p75 = scmp.eq.s32.totalorder %s16, 3
      %p76 = por %p74, %p75
      %p77 = scmp.ne.s32.totalorder %s66, %s67
      %p78 = scmp.eq.s32.totalorder %s16, 0
      %p79 = por %p77, %p78
      %p80 = scmp.ne.s32.totalorder %s66, %s67
      %p81 = scmp.eq.s32.totalorder %s17, 3
      %p82 = por %p80, %p81
      %p84 = scmp.ne.s32.totalorder %s67, %s83
      %p85 = scmp.eq.s32.totalorder %s17, 0
      %p86 = por %p84, %p85
      %s87 = ssub.s32 %s18, %s30
      %p88 = scmp.eq.s32.totalorder %s87, 0
      %s90 = sadd.s32 %s89, 1
      %s91 = scalar_select %p88, %s89, %s90
      %p94 = pneg %p88
      %p95 = scmp.eq.s32.totalorder %s11, 3
      %p96 = por %p94, %p95
      %p97 = scmp.ne.s32.totalorder %s89, %s92
      %p98 = scmp.eq.s32.totalorder %s11, 0
      %p99 = por %p97, %p98
      %p100 = scmp.ne.s32.totalorder %s89, %s92
      %p101 = scmp.eq.s32.totalorder %s16, 3
      %p102 = por %p100, %p101
      %p103 = scmp.ne.s32.totalorder %s92, %s93
      %p104 = scmp.eq.s32.totalorder %s16, 0
      %p105 = por %p103, %p104
      %p106 = scmp.ne.s32.totalorder %s92, %s93
      %p107 = scmp.eq.s32.totalorder %s17, 3
      %p108 = por %p106, %p107
      %p110 = scmp.ne.s32.totalorder %s93, %s109
      %p111 = scmp.eq.s32.totalorder %s17, 0
      %p112 = por %p110, %p111
      %p113 = scmp.le.s32.totalorder 1, %s11
      %p114 = scmp.lt.s32.totalorder %s11, 5
      %p115 = pnand %p113, %p114
      %p116 = pneg %p115
      // Predicated region
      $region9: #{tpu_custom_call.1} parent=5 // pred_check
        _
      $region10: #{tpu_custom_call.1} parent=5 // pred_check_branch
        %118 = sbr.rel (%p115) target = $region12
      $region11: #{tpu_custom_call.1} parent=5 // pred_region
        %s119 = ssub.s32 %s11, 1
      $region12: #{tpu_custom_call.1} parent=5 // pred_fallthru
        _
      %p120 = scmp.lt.s32.totalorder %s11, 4
      // Predicated region
      $region13: #{tpu_custom_call.1} parent=5 // pred_check
        %p121 = pneg %p120
      $region14: #{tpu_custom_call.1} parent=5 // pred_check_branch
        %123 = sbr.rel (%p121) target = $region16
      $region15: #{tpu_custom_call.1} parent=5 // pred_region
        // Predicated region
        $region17: #{tpu_custom_call.1} parent=15 // pred_check
          %p124 = pneg %p45
        $region18: #{tpu_custom_call.1} parent=15 // pred_check_branch
          %126 = sbr.rel (%p124) target = $region20
        $region19: #{tpu_custom_call.1} parent=15 // pred_region
          %s127 = sand.u32 %s35, 1
          %s128 = sand.u32 %s35, 1
          %s129 = smul.addr %s128, 32
          %s130 = scalar_lea.vmem [#allocation2], %s129
          %s131 = smul.u32 8, %s18
          %s132 = smul.addr %s131, 2
          %s133 = sadd.s32 %s19, %s132
          %s134 = smul.addr %s133, 4
          %s135 = scalar_lea.vmem %s0, %s134
          // Predicated region
          $region21: #{tpu_custom_call.1} parent=19 // pred_check
            _
          $region22: #{tpu_custom_call.1} parent=19 // pred_check_branch
            %137 = sbr.rel (0) target = $region24
          $region23: #{tpu_custom_call.1} parent=19 // pred_region
            // Predicated region
            $region25: #{tpu_custom_call.1} parent=23 // pred_check
              _
            $region26: #{tpu_custom_call.1} parent=23 // pred_check_branch
              %139 = sbr.rel target = $region28
            $region27: #{tpu_custom_call.1} parent=23 // pred_region
              // Predicated region
              $region40: #{tpu_custom_call.1} parent=27 // pred_check
                _
              $region41: #{tpu_custom_call.1} parent=27 // pred_check_branch
                %168 = sbr.rel (0) target = $region43
              $region42: #{tpu_custom_call.1} parent=27 // pred_region
                loop: start=0, step=1, limit=1
                $region44: #{tpu_custom_call.1} parent=42 // loop_pre_header
                  _
                $region45: #{tpu_custom_call.1} parent=42 // loop_header
                  %s170 = sphi 0, %s174
                  %p171 = scmp.ge.s32.totalorder %s170, 1
                  %s175 = sphi %s135, %s135
                  %s176 = sphi %s130, %s130
                $region46: #{tpu_custom_call.1} parent=42 // loop_header_branch
                  %173 = sbr.rel (%p171) target = $region50
                $region47: #{tpu_custom_call.1} parent=42 // loop_body
                  _
                $region48: #{tpu_custom_call.1} parent=42 // loop_footer
                  %s174 = sadd.s32 1, %s170
                $region49: #{tpu_custom_call.1} parent=42 // loop_footer_branch
                  %169 = sbr.rel target = $region45
                $region50: #{tpu_custom_call.1} parent=42 // loop_exit
                  _
                loop: start=0, step=1, limit=1
                $region51: #{tpu_custom_call.1} parent=42 // loop_pre_header
                  _
                $region52: #{tpu_custom_call.1} parent=42 // loop_header
                  %s179 = sphi 0, %s183
                  %p180 = scmp.ge.s32.totalorder %s179, 1
                  %s184 = sphi %s135, %s135
                  %s185 = sphi %s130, %s130
                $region53: #{tpu_custom_call.1} parent=42 // loop_header_branch
                  %182 = sbr.rel (%p180) target = $region57
                $region54: #{tpu_custom_call.1} parent=42 // loop_body
                  %v186 = vld [vmem:[%s184] sm:$0xf]
                  %187 = vst [vmem:[%s185] sm:$0xf] %v186
                  %v188 = vld [vmem:[%s184 + $0x8] sm:$0xf]
                  %189 = vst [vmem:[%s185 + $0x4] sm:$0xf] %v188
                  %v190 = vld [vmem:[%s184 + $0x10] sm:$0xf]
                  %191 = vst [vmem:[%s185 + $0x8] sm:$0xf] %v190
                  %v192 = vld [vmem:[%s184 + $0x18] sm:$0xf]
                  %193 = vst [vmem:[%s185 + $0xc] sm:$0xf] %v192
                  %v194 = vld [vmem:[%s184 + $0x20] sm:$0xf]
                  %195 = vst [vmem:[%s185 + $0x10] sm:$0xf] %v194
                  %v196 = vld [vmem:[%s184 + $0x28] sm:$0xf]
                  %197 = vst [vmem:[%s185 + $0x14] sm:$0xf] %v196
                  %v198 = vld [vmem:[%s184 + $0x30] sm:$0xf]
                  %199 = vst [vmem:[%s185 + $0x18] sm:$0xf] %v198
                  %v200 = vld [vmem:[%s184 + $0x38] sm:$0xf]
                  %201 = vst [vmem:[%s185 + $0x1c] sm:$0xf] %v200
                $region55: #{tpu_custom_call.1} parent=42 // loop_footer
                  %s183 = sadd.s32 1, %s179
                $region56: #{tpu_custom_call.1} parent=42 // loop_footer_branch
                  %178 = sbr.rel target = $region52
                $region57: #{tpu_custom_call.1} parent=42 // loop_exit
                  _
              $region43: #{tpu_custom_call.1} parent=27 // pred_fallthru
                _
            $region28: #{tpu_custom_call.1} parent=23 // pred_fallthru
              _
            // Predicated region
            $region29: #{tpu_custom_call.1} parent=23 // pred_check
              _
            $region30: #{tpu_custom_call.1} parent=23 // pred_check_branch
              %141 = sbr.rel (0) target = $region32
            $region31: #{tpu_custom_call.1} parent=23 // pred_region
              loop: start=0, step=1, limit=1
              $region33: #{tpu_custom_call.1} parent=31 // loop_pre_header
                _
              $region34: #{tpu_custom_call.1} parent=31 // loop_header
                %s144 = sphi 0, %s148
                %p145 = scmp.ge.s32.totalorder %s144, 1
                %s149 = sphi %s135, %s135
                %s150 = sphi %s130, %s130
              $region35: #{tpu_custom_call.1} parent=31 // loop_header_branch
                %147 = sbr.rel (%p145) target = $region39
              $region36: #{tpu_custom_call.1} parent=31 // loop_body
                %v151 = vld [vmem:[%s149] sm:$0xf]
                %152 = vst [vmem:[%s150] sm:$0xf] %v151
                %v153 = vld [vmem:[%s149 + $0x8] sm:$0xf]
                %154 = vst [vmem:[%s150 + $0x4] sm:$0xf] %v153
                %v155 = vld [vmem:[%s149 + $0x10] sm:$0xf]
                %156 = vst [vmem:[%s150 + $0x8] sm:$0xf] %v155
                %v157 = vld [vmem:[%s149 + $0x18] sm:$0xf]
                %158 = vst [vmem:[%s150 + $0xc] sm:$0xf] %v157
                %v159 = vld [vmem:[%s149 + $0x20] sm:$0xf]
                %160 = vst [vmem:[%s150 + $0x10] sm:$0xf] %v159
                %v161 = vld [vmem:[%s149 + $0x28] sm:$0xf]
                %162 = vst [vmem:[%s150 + $0x14] sm:$0xf] %v161
                %v163 = vld [vmem:[%s149 + $0x30] sm:$0xf]
                %164 = vst [vmem:[%s150 + $0x18] sm:$0xf] %v163
                %v165 = vld [vmem:[%s149 + $0x38] sm:$0xf]
                %166 = vst [vmem:[%s150 + $0x1c] sm:$0xf] %v165
              $region37: #{tpu_custom_call.1} parent=31 // loop_footer
                %s148 = sadd.s32 1, %s144
              $region38: #{tpu_custom_call.1} parent=31 // loop_footer_branch
                %143 = sbr.rel target = $region34
              $region39: #{tpu_custom_call.1} parent=31 // loop_exit
                _
            $region32: #{tpu_custom_call.1} parent=23 // pred_fallthru
              _
          $region24: #{tpu_custom_call.1} parent=19 // pred_fallthru
            _
          %202 = vnop
        $region20: #{tpu_custom_call.1} parent=15 // pred_fallthru
          _
        // Predicated region
        $region58: #{tpu_custom_call.1} parent=15 // pred_check
          %p203 = pneg %p73
        $region59: #{tpu_custom_call.1} parent=15 // pred_check_branch
          %205 = sbr.rel (%p203) target = $region61
        $region60: #{tpu_custom_call.1} parent=15 // pred_region
          %s206 = sand.u32 %s63, 1
          %s207 = sand.u32 %s63, 1
          %s208 = smul.addr %s207, 128
          %s209 = scalar_lea.vmem [#allocation3], %s208
          %s210 = smul.u32 8, %s18
          %s211 = smul.addr %s210, 4
          %s212 = sadd.s32 %s19, %s211
          %s213 = smul.addr %s212, 8
          %s214 = scalar_lea.vmem %s1, %s213
          // Predicated region
          $region62: #{tpu_custom_call.1} parent=60 // pred_check
            _
          $region63: #{tpu_custom_call.1} parent=60 // pred_check_branch
            %216 = sbr.rel (0) target = $region65
          $region64: #{tpu_custom_call.1} parent=60 // pred_region
            // Predicated region
            $region66: #{tpu_custom_call.1} parent=64 // pred_check
              _
            $region67: #{tpu_custom_call.1} parent=64 // pred_check_branch
              %218 = sbr.rel (0) target = $region69
            $region68: #{tpu_custom_call.1} parent=64 // pred_region
              // Predicated region
              $region81: #{tpu_custom_call.1} parent=68 // pred_check
                _
              $region82: #{tpu_custom_call.1} parent=68 // pred_check_branch
                %263 = sbr.rel (0) target = $region84
              $region83: #{tpu_custom_call.1} parent=68 // pred_region
                loop: start=0, step=1, limit=1
                $region85: #{tpu_custom_call.1} parent=83 // loop_pre_header
                  _
                $region86: #{tpu_custom_call.1} parent=83 // loop_header
                  %s265 = sphi 0, %s269
                  %p266 = scmp.ge.s32.totalorder %s265, 1
                  %s270 = sphi %s214, %s214
                  %s271 = sphi %s209, %s209
                $region87: #{tpu_custom_call.1} parent=83 // loop_header_branch
                  %268 = sbr.rel (%p266) target = $region91
                $region88: #{tpu_custom_call.1} parent=83 // loop_body
                  %v272 = vld [vmem:[%s270] sm:$0xff]
                  %273 = vst [vmem:[%s271] sm:$0xff] %v272
                  %v274 = vld [vmem:[%s270 + $0x10] sm:$0xff]
                  %275 = vst [vmem:[%s271 + $0x8] sm:$0xff] %v274
                  %v276 = vld [vmem:[%s270 + $0x20] sm:$0xff]
                  %277 = vst [vmem:[%s271 + $0x10] sm:$0xff] %v276
                  %v278 = vld [vmem:[%s270 + $0x30] sm:$0xff]
                  %279 = vst [vmem:[%s271 + $0x18] sm:$0xff] %v278
                  %v280 = vld [vmem:[%s270 + $0x40] sm:$0xff]
                  %281 = vst [vmem:[%s271 + $0x20] sm:$0xff] %v280
                  %v282 = vld [vmem:[%s270 + $0x50] sm:$0xff]
                  %283 = vst [vmem:[%s271 + $0x28] sm:$0xff] %v282
                  %v284 = vld [vmem:[%s270 + $0x60] sm:$0xff]
                  %285 = vst [vmem:[%s271 + $0x30] sm:$0xff] %v284
                  %v286 = vld [vmem:[%s270 + $0x70] sm:$0xff]
                  %287 = vst [vmem:[%s271 + $0x38] sm:$0xff] %v286
                  %v288 = vld [vmem:[%s270 + $0x80] sm:$0xff]
                  %289 = vst [vmem:[%s271 + $0x40] sm:$0xff] %v288
                  %v290 = vld [vmem:[%s270 + $0x90] sm:$0xff]
                  %291 = vst [vmem:[%s271 + $0x48] sm:$0xff] %v290
                  %v292 = vld [vmem:[%s270 + $0xa0] sm:$0xff]
                  %293 = vst [vmem:[%s271 + $0x50] sm:$0xff] %v292
                  %v294 = vld [vmem:[%s270 + $0xb0] sm:$0xff]
                  %295 = vst [vmem:[%s271 + $0x58] sm:$0xff] %v294
                  %v296 = vld [vmem:[%s270 + $0xc0] sm:$0xff]
                  %297 = vst [vmem:[%s271 + $0x60] sm:$0xff] %v296
                  %v298 = vld [vmem:[%s270 + $0xd0] sm:$0xff]
                  %299 = vst [vmem:[%s271 + $0x68] sm:$0xff] %v298
                  %v300 = vld [vmem:[%s270 + $0xe0] sm:$0xff]
                  %301 = vst [vmem:[%s271 + $0x70] sm:$0xff] %v300
                  %v302 = vld [vmem:[%s270 + $0xf0] sm:$0xff]
                  %303 = vst [vmem:[%s271 + $0x78] sm:$0xff] %v302
                $region89: #{tpu_custom_call.1} parent=83 // loop_footer
                  %s269 = sadd.s32 1, %s265
                $region90: #{tpu_custom_call.1} parent=83 // loop_footer_branch
                  %264 = sbr.rel target = $region86
                $region91: #{tpu_custom_call.1} parent=83 // loop_exit
                  _
              $region84: #{tpu_custom_call.1} parent=68 // pred_fallthru
                _
              // Predicated region
              $region92: #{tpu_custom_call.1} parent=68 // pred_check
                _
              $region93: #{tpu_custom_call.1} parent=68 // pred_check_branch
                %305 = sbr.rel target = $region95
              $region94: #{tpu_custom_call.1} parent=68 // pred_region
                _
              $region95: #{tpu_custom_call.1} parent=68 // pred_fallthru
                _
            $region69: #{tpu_custom_call.1} parent=64 // pred_fallthru
              _
            // Predicated region
            $region70: #{tpu_custom_call.1} parent=64 // pred_check
              _
            $region71: #{tpu_custom_call.1} parent=64 // pred_check_branch
              %220 = sbr.rel target = $region73
            $region72: #{tpu_custom_call.1} parent=64 // pred_region
              loop: start=0, step=1, limit=1
              $region74: #{tpu_custom_call.1} parent=72 // loop_pre_header
                _
              $region75: #{tpu_custom_call.1} parent=72 // loop_header
                %s223 = sphi 0, %s227
                %p224 = scmp.ge.s32.totalorder %s223, 1
                %s228 = sphi %s214, %s214
                %s229 = sphi %s209, %s209
              $region76: #{tpu_custom_call.1} parent=72 // loop_header_branch
                %226 = sbr.rel (%p224) target = $region80
              $region77: #{tpu_custom_call.1} parent=72 // loop_body
                %v230 = vld [vmem:[%s228] sm:$0xff]
                %231 = vst [vmem:[%s229] sm:$0xff] %v230
                %v232 = vld [vmem:[%s228 + $0x10] sm:$0xff]
                %233 = vst [vmem:[%s229 + $0x8] sm:$0xff] %v232
                %v234 = vld [vmem:[%s228 + $0x20] sm:$0xff]
                %235 = vst [vmem:[%s229 + $0x10] sm:$0xff] %v234
                %v236 = vld [vmem:[%s228 + $0x30] sm:$0xff]
                %237 = vst [vmem:[%s229 + $0x18] sm:$0xff] %v236
                %v238 = vld [vmem:[%s228 + $0x40] sm:$0xff]
                %239 = vst [vmem:[%s229 + $0x20] sm:$0xff] %v238
                %v240 = vld [vmem:[%s228 + $0x50] sm:$0xff]
                %241 = vst [vmem:[%s229 + $0x28] sm:$0xff] %v240
                %v242 = vld [vmem:[%s228 + $0x60] sm:$0xff]
                %243 = vst [vmem:[%s229 + $0x30] sm:$0xff] %v242
                %v244 = vld [vmem:[%s228 + $0x70] sm:$0xff]
                %245 = vst [vmem:[%s229 + $0x38] sm:$0xff] %v244
                %v246 = vld [vmem:[%s228 + $0x80] sm:$0xff]
                %247 = vst [vmem:[%s229 + $0x40] sm:$0xff] %v246
                %v248 = vld [vmem:[%s228 + $0x90] sm:$0xff]
                %249 = vst [vmem:[%s229 + $0x48] sm:$0xff] %v248
                %v250 = vld [vmem:[%s228 + $0xa0] sm:$0xff]
                %251 = vst [vmem:[%s229 + $0x50] sm:$0xff] %v250
                %v252 = vld [vmem:[%s228 + $0xb0] sm:$0xff]
                %253 = vst [vmem:[%s229 + $0x58] sm:$0xff] %v252
                %v254 = vld [vmem:[%s228 + $0xc0] sm:$0xff]
                %255 = vst [vmem:[%s229 + $0x60] sm:$0xff] %v254
                %v256 = vld [vmem:[%s228 + $0xd0] sm:$0xff]
                %257 = vst [vmem:[%s229 + $0x68] sm:$0xff] %v256
                %v258 = vld [vmem:[%s228 + $0xe0] sm:$0xff]
                %259 = vst [vmem:[%s229 + $0x70] sm:$0xff] %v258
                %v260 = vld [vmem:[%s228 + $0xf0] sm:$0xff]
                %261 = vst [vmem:[%s229 + $0x78] sm:$0xff] %v260
              $region78: #{tpu_custom_call.1} parent=72 // loop_footer
                %s227 = sadd.s32 1, %s223
              $region79: #{tpu_custom_call.1} parent=72 // loop_footer_branch
                %222 = sbr.rel target = $region75
              $region80: #{tpu_custom_call.1} parent=72 // loop_exit
                _
            $region73: #{tpu_custom_call.1} parent=64 // pred_fallthru
              _
          $region65: #{tpu_custom_call.1} parent=60 // pred_fallthru
            _
          %306 = vnop
        $region61: #{tpu_custom_call.1} parent=15 // pred_fallthru
          _
      $region16: #{tpu_custom_call.1} parent=5 // pred_fallthru
        _
      %p307 = scmp.le.s32.totalorder 1, %s11
      %p308 = scmp.lt.s32.totalorder %s11, 5
      %p309 = pnand %p307, %p308
      %p310 = pneg %p309
      // Predicated region
      $region96: #{tpu_custom_call.1} parent=5 // pred_check
        _
      $region97: #{tpu_custom_call.1} parent=5 // pred_check_branch
        %312 = sbr.rel (%p309) target = $region99
      $region98: #{tpu_custom_call.1} parent=5 // pred_region
        %s313 = ssub.s32 %s11, 1
        %s314 = sand.u32 %s38, 1
        %s315 = sand.u32 %s38, 1
        %s316 = smul.addr %s315, 32
        %s317 = scalar_lea.vmem [#allocation2], %s316
        // Predicated region
        $region100: #{tpu_custom_call.1} parent=98 // pred_check
          %p318 = pneg %p51
        $region101: #{tpu_custom_call.1} parent=98 // pred_check_branch
          %320 = sbr.rel (%p318) target = $region103
        $region102: #{tpu_custom_call.1} parent=98 // pred_region
          _
        $region103: #{tpu_custom_call.1} parent=98 // pred_fallthru
          _
        %s321 = sand.u32 %s66, 1
        %s322 = sand.u32 %s66, 1
        %s323 = smul.addr %s322, 128
        %s324 = scalar_lea.vmem [#allocation3], %s323
        // Predicated region
        $region104: #{tpu_custom_call.1} parent=98 // pred_check
          %p325 = pneg %p79
        $region105: #{tpu_custom_call.1} parent=98 // pred_check_branch
          %327 = sbr.rel (%p325) target = $region107
        $region106: #{tpu_custom_call.1} parent=98 // pred_region
          _
        $region107: #{tpu_custom_call.1} parent=98 // pred_fallthru
          _
        %s328 = sand.u32 %s38, 1
        %s329 = sand.u32 %s38, 1
        %s330 = smul.addr %s329, 32
        %s331 = scalar_lea.vmem [#allocation2], %s330
        %p332 = pneg %p51
        %p333 = pneg %p48
        %s334 = sand.u32 %s66, 1
        %s335 = sand.u32 %s66, 1
        %s336 = smul.addr %s335, 128
        %s337 = scalar_lea.vmem [#allocation3], %s336
        %p338 = pneg %p79
        %p339 = pneg %p76
        %p340 = pneg %p105
        %p341 = pneg %p102
        %s342 = sand.u32 %s92, 1
        %s343 = scalar_lea.sflag [#allocation5], %s342
        %s344 = sand.u32 %s92, 1
        %s345 = smul.addr %s344, 8
        %s346 = scalar_lea.vmem [#allocation4], %s345
        %s347 = smul.u32 8, %s20
        %s348 = smul.u32 8, %s20
        %v349 = vld [vmem:[%s317] sm:$0xf]
        %v350 = vld [vmem:[%s317 + $0x4] sm:$0xf]
        %v351 = vld [vmem:[%s317 + $0x8] sm:$0xf]
        %v352 = vld [vmem:[%s317 + $0xc] sm:$0xf]
        %v353 = vld [vmem:[%s317 + $0x10] sm:$0xf]
        %v354 = vld [vmem:[%s317 + $0x14] sm:$0xf]
        %v355 = vld [vmem:[%s317 + $0x18] sm:$0xf]
        %v356 = vld [vmem:[%s317 + $0x1c] sm:$0xf]
        %vm357 = vcmask 1043456
        %v358 = vsel %vm357, %v349, -inf
        %359 = vmax.xlane.f32.xlu0 %v358
        %v360 = vpop.xlane.xlu0 %359
        %v361 = vsel %vm357, %v350, -inf
        %362 = vmax.xlane.f32.xlu0 %v361
        %v363 = vpop.xlane.xlu0 %362
        %v364 = vsel %vm357, %v351, -inf
        %365 = vmax.xlane.f32.xlu0 %v364
        %v366 = vpop.xlane.xlu0 %365
        %v367 = vsel %vm357, %v352, -inf
        %368 = vmax.xlane.f32.xlu0 %v367
        %v369 = vpop.xlane.xlu0 %368
        %v370 = vsel %vm357, %v353, -inf
        %371 = vmax.xlane.f32.xlu0 %v370
        %v372 = vpop.xlane.xlu0 %371
        %v373 = vsel %vm357, %v354, -inf
        %374 = vmax.xlane.f32.xlu0 %v373
        %v375 = vpop.xlane.xlu0 %374
        %v376 = vsel %vm357, %v355, -inf
        %377 = vmax.xlane.f32.xlu0 %v376
        %v378 = vpop.xlane.xlu0 %377
        %v379 = vsel %vm357, %v356, -inf
        %380 = vmax.xlane.f32.xlu0 %v379
        %v381 = vpop.xlane.xlu0 %380
        %v382 = vld [vmem:[%s324] sm:$0xff]
        %v383 = vld [vmem:[%s324 + $0x8] sm:$0xf]
        %v384 = vld [vmem:[%s324 + $0x10] sm:$0xff]
        %v385 = vld [vmem:[%s324 + $0x18] sm:$0xf]
        %v386 = vld [vmem:[%s324 + $0x20] sm:$0xff]
        %v387 = vld [vmem:[%s324 + $0x28] sm:$0xf]
        %v388 = vld [vmem:[%s324 + $0x30] sm:$0xff]
        %v389 = vld [vmem:[%s324 + $0x38] sm:$0xf]
        %v390 = vld [vmem:[%s324 + $0x40] sm:$0xff]
        %v391 = vld [vmem:[%s324 + $0x48] sm:$0xf]
        %v392 = vld [vmem:[%s324 + $0x50] sm:$0xff]
        %v393 = vld [vmem:[%s324 + $0x58] sm:$0xf]
        %v394 = vld [vmem:[%s324 + $0x60] sm:$0xff]
        %v395 = vld [vmem:[%s324 + $0x68] sm:$0xf]
        %v396 = vld [vmem:[%s324 + $0x70] sm:$0xff]
        %v397 = vld [vmem:[%s324 + $0x78] sm:$0xf]
        %398 = vmax.xlane.f32.xlu0 %v382
        %v399 = vpop.xlane.xlu0 %398
        %v400 = vsel %vm357, %v383, -inf
        %401 = vmax.xlane.f32.xlu0 %v400
        %v402 = vpop.xlane.xlu0 %401
        %403 = vmax.xlane.f32.xlu0 %v384
        %v404 = vpop.xlane.xlu0 %403
        %v405 = vsel %vm357, %v385, -inf
        %406 = vmax.xlane.f32.xlu0 %v405
        %v407 = vpop.xlane.xlu0 %406
        %408 = vmax.xlane.f32.xlu0 %v386
        %v409 = vpop.xlane.xlu0 %408
        %v410 = vsel %vm357, %v387, -inf
        %411 = vmax.xlane.f32.xlu0 %v410
        %v412 = vpop.xlane.xlu0 %411
        %413 = vmax.xlane.f32.xlu0 %v388
        %v414 = vpop.xlane.xlu0 %413
        %v415 = vsel %vm357, %v389, -inf
        %416 = vmax.xlane.f32.xlu0 %v415
        %v417 = vpop.xlane.xlu0 %416
        %418 = vmax.xlane.f32.xlu0 %v390
        %v419 = vpop.xlane.xlu0 %418
        %v420 = vsel %vm357, %v391, -inf
        %421 = vmax.xlane.f32.xlu0 %v420
        %v422 = vpop.xlane.xlu0 %421
        %423 = vmax.xlane.f32.xlu0 %v392
        %v424 = vpop.xlane.xlu0 %423
        %v425 = vsel %vm357, %v393, -inf
        %426 = vmax.xlane.f32.xlu0 %v425
        %v427 = vpop.xlane.xlu0 %426
        %428 = vmax.xlane.f32.xlu0 %v394
        %v429 = vpop.xlane.xlu0 %428
        %v430 = vsel %vm357, %v395, -inf
        %431 = vmax.xlane.f32.xlu0 %v430
        %v432 = vpop.xlane.xlu0 %431
        %433 = vmax.xlane.f32.xlu0 %v396
        %v434 = vpop.xlane.xlu0 %433
        %v435 = vsel %vm357, %v397, -inf
        %436 = vmax.xlane.f32.xlu0 %v435
        %v437 = vpop.xlane.xlu0 %436
        %p438 = scmp.eq.s32.totalorder %s21, 0
        // Predicated region
        $region108: #{tpu_custom_call.1} parent=98 // pred_check
          %p439 = pneg %p438
        $region109: #{tpu_custom_call.1} parent=98 // pred_check_branch
          %441 = sbr.rel (%p439) target = $region111
        $region110: #{tpu_custom_call.1} parent=98 // pred_region
          %v450 = vlaneseq
          %v451 = vand.u32 %v450, 127
          %v452 = vlaneseq
          %v453 = vshrl.u32 %v452, 7
          %v454 = vsub.s32 %v451, %v453
          %v455 = vrot.slane %v360, %v454
          %v456 = vlaneseq
          %v457 = vshrl.u32 %v456, 7
          %v458 = vsub.s32 %v451, %v457
          %v459 = vrot.slane %v363, %v458
          %v460 = vlaneseq
          %v461 = vshrl.u32 %v460, 7
          %v462 = vsub.s32 %v451, %v461
          %v463 = vrot.slane %v366, %v462
          %v464 = vlaneseq
          %v465 = vshrl.u32 %v464, 7
          %v466 = vsub.s32 %v451, %v465
          %v467 = vrot.slane %v369, %v466
          %v468 = vlaneseq
          %v469 = vshrl.u32 %v468, 7
          %v470 = vsub.s32 %v451, %v469
          %v471 = vrot.slane %v372, %v470
          %v472 = vlaneseq
          %v473 = vshrl.u32 %v472, 7
          %v474 = vsub.s32 %v451, %v473
          %v475 = vrot.slane %v375, %v474
          %v476 = vlaneseq
          %v477 = vshrl.u32 %v476, 7
          %v478 = vsub.s32 %v451, %v477
          %v479 = vrot.slane %v378, %v478
          %v480 = vlaneseq
          %v481 = vshrl.u32 %v480, 7
          %v482 = vsub.s32 %v451, %v481
          %v483 = vrot.slane %v381, %v482
          %vm484 = vcmask 1041409
          %v485 = vsel %vm484, %v459, %v455
          %vm486 = vcmask 1042434
          %v487 = vsel %vm486, %v463, %v485
          %vm488 = vcmask 1043459
          %v489 = vsel %vm488, %v467, %v487
          %vm490 = vcmask 1044484
          %v491 = vsel %vm490, %v471, %v489
          %vm492 = vcmask 1045509
          %v493 = vsel %vm492, %v475, %v491
          %vm494 = vcmask 1046534
          %v495 = vsel %vm494, %v479, %v493
          %vm496 = vcmask 1047559
          %v497 = vsel %vm496, %v483, %v495
          %vm499 = vcmask 31744
          %500 = vst.msk [vmem:[%s346] sm:$0xff] %vm499, %v497
          %v517 = vadd.s32 %v451, 4294967292
          %v518 = vlaneseq
          %v519 = vshrl.u32 %v518, 7
          %v520 = vsub.s32 %v517, %v519
          %v521 = vrot.slane %v399, %v520
          %v522 = vadd.s32 %v451, 4294967284
          %v523 = vlaneseq
          %v524 = vshrl.u32 %v523, 7
          %v525 = vsub.s32 %v522, %v524
          %v526 = vrot.slane %v402, %v525
          %vm527 = vcmask 162912
          %v528 = vsel %vm527, %v526, %v521
          %v529 = vlaneseq
          %v530 = vshrl.u32 %v529, 7
          %v531 = vsub.s32 %v517, %v530
          %v532 = vrot.slane %v404, %v531
          %v533 = vlaneseq
          %v534 = vshrl.u32 %v533, 7
          %v535 = vsub.s32 %v522, %v534
          %v536 = vrot.slane %v407, %v535
          %v537 = vsel %vm527, %v536, %v532
          %v538 = vlaneseq
          %v539 = vshrl.u32 %v538, 7
          %v540 = vsub.s32 %v517, %v539
          %v541 = vrot.slane %v409, %v540
          %v542 = vlaneseq
          %v543 = vshrl.u32 %v542, 7
          %v544 = vsub.s32 %v522, %v543
          %v545 = vrot.slane %v412, %v544
          %v546 = vsel %vm527, %v545, %v541
          %v547 = vlaneseq
          %v548 = vshrl.u32 %v547, 7
          %v549 = vsub.s32 %v517, %v548
          %v550 = vrot.slane %v414, %v549
          %v551 = vlaneseq
          %v552 = vshrl.u32 %v551, 7
          %v553 = vsub.s32 %v522, %v552
          %v554 = vrot.slane %v417, %v553
          %v555 = vsel %vm527, %v554, %v550
          %v556 = vlaneseq
          %v557 = vshrl.u32 %v556, 7
          %v558 = vsub.s32 %v517, %v557
          %v559 = vrot.slane %v419, %v558
          %v560 = vlaneseq
          %v561 = vshrl.u32 %v560, 7
          %v562 = vsub.s32 %v522, %v561
          %v563 = vrot.slane %v422, %v562
          %v564 = vsel %vm527, %v563, %v559
          %v565 = vlaneseq
          %v566 = vshrl.u32 %v565, 7
          %v567 = vsub.s32 %v517, %v566
          %v568 = vrot.slane %v424, %v567
          %v569 = vlaneseq
          %v570 = vshrl.u32 %v569, 7
          %v571 = vsub.s32 %v522, %v570
          %v572 = vrot.slane %v427, %v571
          %v573 = vsel %vm527, %v572, %v568
          %v574 = vlaneseq
          %v575 = vshrl.u32 %v574, 7
          %v576 = vsub.s32 %v517, %v575
          %v577 = vrot.slane %v429, %v576
          %v578 = vlaneseq
          %v579 = vshrl.u32 %v578, 7
          %v580 = vsub.s32 %v522, %v579
          %v581 = vrot.slane %v432, %v580
          %v582 = vsel %vm527, %v581, %v577
          %v583 = vlaneseq
          %v584 = vshrl.u32 %v583, 7
          %v585 = vsub.s32 %v517, %v584
          %v586 = vrot.slane %v434, %v585
          %v587 = vlaneseq
          %v588 = vshrl.u32 %v587, 7
          %v589 = vsub.s32 %v522, %v588
          %v590 = vrot.slane %v437, %v589
          %v591 = vsel %vm527, %v590, %v586
          %v592 = vsel %vm484, %v537, %v528
          %v593 = vsel %vm486, %v546, %v592
          %v594 = vsel %vm488, %v555, %v593
          %v595 = vsel %vm490, %v564, %v594
          %v596 = vsel %vm492, %v573, %v595
          %v597 = vsel %vm494, %v582, %v596
          %v598 = vsel %vm496, %v591, %v597
          %vm600 = vcmask 130080
          %601 = vst.msk [vmem:[%s346] sm:$0xff] %vm600, %v598
        $region111: #{tpu_custom_call.1} parent=98 // pred_fallthru
          _
        %p602 = scmp.ne.s32.totalorder %s21, 0
        // Predicated region
        $region112: #{tpu_custom_call.1} parent=98 // pred_check
          %p603 = pneg %p602
        $region113: #{tpu_custom_call.1} parent=98 // pred_check_branch
          %605 = sbr.rel (%p603) target = $region115
        $region114: #{tpu_custom_call.1} parent=98 // pred_region
          %v606 = vld [vmem:[%s346] sm:$0xff]
          %v615 = vlaneseq
          %v616 = vand.u32 %v615, 127
          %v617 = vlaneseq
          %v618 = vshrl.u32 %v617, 7
          %v619 = vsub.s32 %v616, %v618
          %v620 = vrot.slane %v360, %v619
          %v621 = vlaneseq
          %v622 = vshrl.u32 %v621, 7
          %v623 = vsub.s32 %v616, %v622
          %v624 = vrot.slane %v363, %v623
          %v625 = vlaneseq
          %v626 = vshrl.u32 %v625, 7
          %v627 = vsub.s32 %v616, %v626
          %v628 = vrot.slane %v366, %v627
          %v629 = vlaneseq
          %v630 = vshrl.u32 %v629, 7
          %v631 = vsub.s32 %v616, %v630
          %v632 = vrot.slane %v369, %v631
          %v633 = vlaneseq
          %v634 = vshrl.u32 %v633, 7
          %v635 = vsub.s32 %v616, %v634
          %v636 = vrot.slane %v372, %v635
          %v637 = vlaneseq
          %v638 = vshrl.u32 %v637, 7
          %v639 = vsub.s32 %v616, %v638
          %v640 = vrot.slane %v375, %v639
          %v641 = vlaneseq
          %v642 = vshrl.u32 %v641, 7
          %v643 = vsub.s32 %v616, %v642
          %v644 = vrot.slane %v378, %v643
          %v645 = vlaneseq
          %v646 = vshrl.u32 %v645, 7
          %v647 = vsub.s32 %v616, %v646
          %v648 = vrot.slane %v381, %v647
          %vm649 = vcmask 1041409
          %v650 = vsel %vm649, %v624, %v620
          %vm651 = vcmask 1042434
          %v652 = vsel %vm651, %v628, %v650
          %vm653 = vcmask 1043459
          %v654 = vsel %vm653, %v632, %v652
          %vm655 = vcmask 1044484
          %v656 = vsel %vm655, %v636, %v654
          %vm657 = vcmask 1045509
          %v658 = vsel %vm657, %v640, %v656
          %vm659 = vcmask 1046534
          %v660 = vsel %vm659, %v644, %v658
          %vm661 = vcmask 1047559
          %v662 = vsel %vm661, %v648, %v660
          %v664 = vmax.f32 %v606, %v662
          %vm665 = vcmask 31744
          %666 = vst.msk [vmem:[%s346] sm:$0xff] %vm665, %v664
          %v667 = vld [vmem:[%s346] sm:$0xff]
          %v684 = vadd.s32 %v616, 4294967292
          %v685 = vlaneseq
          %v686 = vshrl.u32 %v685, 7
          %v687 = vsub.s32 %v684, %v686
          %v688 = vrot.slane %v399, %v687
          %v689 = vadd.s32 %v616, 4294967284
          %v690 = vlaneseq
          %v691 = vshrl.u32 %v690, 7
          %v692 = vsub.s32 %v689, %v691
          %v693 = vrot.slane %v402, %v692
          %vm694 = vcmask 162912
          %v695 = vsel %vm694, %v693, %v688
          %v696 = vlaneseq
          %v697 = vshrl.u32 %v696, 7
          %v698 = vsub.s32 %v684, %v697
          %v699 = vrot.slane %v404, %v698
          %v700 = vlaneseq
          %v701 = vshrl.u32 %v700, 7
          %v702 = vsub.s32 %v689, %v701
          %v703 = vrot.slane %v407, %v702
          %v704 = vsel %vm694, %v703, %v699
          %v705 = vlaneseq
          %v706 = vshrl.u32 %v705, 7
          %v707 = vsub.s32 %v684, %v706
          %v708 = vrot.slane %v409, %v707
          %v709 = vlaneseq
          %v710 = vshrl.u32 %v709, 7
          %v711 = vsub.s32 %v689, %v710
          %v712 = vrot.slane %v412, %v711
          %v713 = vsel %vm694, %v712, %v708
          %v714 = vlaneseq
          %v715 = vshrl.u32 %v714, 7
          %v716 = vsub.s32 %v684, %v715
          %v717 = vrot.slane %v414, %v716
          %v718 = vlaneseq
          %v719 = vshrl.u32 %v718, 7
          %v720 = vsub.s32 %v689, %v719
          %v721 = vrot.slane %v417, %v720
          %v722 = vsel %vm694, %v721, %v717
          %v723 = vlaneseq
          %v724 = vshrl.u32 %v723, 7
          %v725 = vsub.s32 %v684, %v724
          %v726 = vrot.slane %v419, %v725
          %v727 = vlaneseq
          %v728 = vshrl.u32 %v727, 7
          %v729 = vsub.s32 %v689, %v728
          %v730 = vrot.slane %v422, %v729
          %v731 = vsel %vm694, %v730, %v726
          %v732 = vlaneseq
          %v733 = vshrl.u32 %v732, 7
          %v734 = vsub.s32 %v684, %v733
          %v735 = vrot.slane %v424, %v734
          %v736 = vlaneseq
          %v737 = vshrl.u32 %v736, 7
          %v738 = vsub.s32 %v689, %v737
          %v739 = vrot.slane %v427, %v738
          %v740 = vsel %vm694, %v739, %v735
          %v741 = vlaneseq
          %v742 = vshrl.u32 %v741, 7
          %v743 = vsub.s32 %v684, %v742
          %v744 = vrot.slane %v429, %v743
          %v745 = vlaneseq
          %v746 = vshrl.u32 %v745, 7
          %v747 = vsub.s32 %v689, %v746
          %v748 = vrot.slane %v432, %v747
          %v749 = vsel %vm694, %v748, %v744
          %v750 = vlaneseq
          %v751 = vshrl.u32 %v750, 7
          %v752 = vsub.s32 %v684, %v751
          %v753 = vrot.slane %v434, %v752
          %v754 = vlaneseq
          %v755 = vshrl.u32 %v754, 7
          %v756 = vsub.s32 %v689, %v755
          %v757 = vrot.slane %v437, %v756
          %v758 = vsel %vm694, %v757, %v753
          %v759 = vsel %vm649, %v704, %v695
          %v760 = vsel %vm651, %v713, %v759
          %v761 = vsel %vm653, %v722, %v760
          %v762 = vsel %vm655, %v731, %v761
          %v763 = vsel %vm657, %v740, %v762
          %v764 = vsel %vm659, %v749, %v763
          %v765 = vsel %vm661, %v758, %v764
          %v767 = vmax.f32 %v667, %v765
          %vm768 = vcmask 130080
          %769 = vst.msk [vmem:[%s346] sm:$0xff] %vm768, %v767
        $region115: #{tpu_custom_call.1} parent=98 // pred_fallthru
          _
        %s770 = sand.u32 %s92, 1
        %s771 = scalar_lea.sflag [#allocation5], %s770
        %s772 = sand.u32 %s92, 1
        %s773 = smul.addr %s772, 8
        %s774 = scalar_lea.vmem [#allocation4], %s773
        // Predicated region
        $region116: #{tpu_custom_call.1} parent=98 // pred_check
          %p775 = pneg %p102
        $region117: #{tpu_custom_call.1} parent=98 // pred_check_branch
          %777 = sbr.rel (%p775) target = $region119
        $region118: #{tpu_custom_call.1} parent=98 // pred_region
          %s779 = ssub.s32 128, 128
          %780 = vsyncadd %s771, %s779
          %s781 = smul.addr %s20, 128
          %s782 = scalar_lea.hbm %s2, %s781
          %s784 = sshll.u32 %s774, 4
          %s785 = int_to_ptr.vmem [resolvable:$true] %s784
          %787 = dma.vmem_to_hbm [thread:$0]  %s785, 128, %s782, %s771
        $region119: #{tpu_custom_call.1} parent=98 // pred_fallthru
          _
      $region99: #{tpu_custom_call.1} parent=5 // pred_fallthru
        _
      %p788 = scmp.le.s32.totalorder 2, %s11
      // Predicated region
      $region120: #{tpu_custom_call.1} parent=5 // pred_check
        %p789 = pneg %p788
      $region121: #{tpu_custom_call.1} parent=5 // pred_check_branch
        %791 = sbr.rel (%p789) target = $region123
      $region122: #{tpu_custom_call.1} parent=5 // pred_region
        %s792 = ssub.s32 %s11, 2
        // Predicated region
        $region124: #{tpu_custom_call.1} parent=122 // pred_check
          %p793 = pneg %p108
        $region125: #{tpu_custom_call.1} parent=122 // pred_check_branch
          %795 = sbr.rel (%p793) target = $region127
        $region126: #{tpu_custom_call.1} parent=122 // pred_region
          %s796 = sand.u32 %s93, 1
          %s797 = scalar_lea.sflag [#allocation5], %s796
          %s798 = sand.u32 %s93, 1
          %s799 = smul.addr %s798, 8
          %s800 = scalar_lea.vmem [#allocation4], %s799
          %801 = dma.done %s797, 128
        $region127: #{tpu_custom_call.1} parent=122 // pred_fallthru
          _
      $region123: #{tpu_custom_call.1} parent=5 // pred_fallthru
        _
    $region6: #{tpu_custom_call.1} parent=1 // loop_footer
      %s15 = sadd.s32 1, %s11
    $region7: #{tpu_custom_call.1} parent=1 // loop_footer_branch
      %10 = sbr.rel target = $region3
    $region8: #{tpu_custom_call.1} parent=1 // loop_exit
      _
    %802 = vsyncpa [#allocation5], 1
    %s803 = scalar_lea.sflag [#allocation5], 1
    %804 = vsyncpa %s803, 1

</llo_original>
